<compile_context>
chip_gen: v7x
topology: tpu7x:2x2x1
jax: 0.10.0
libtpu: 0.0.40
codegen_flags: <defaults>
</compile_context>

<pallas_src>
import functools

import jax
import jax.numpy as jnp
from jax import lax
from jax.experimental import pallas as pl
from jax.experimental.pallas import tpu as pltpu

_EPS2 = 1e-24  # (F.normalize eps=1e-12) squared, for rsqrt(max(sumsq, eps^2))


def _cosface_kernel(xn_ref, wn_ref, label_ref, out_ref, *, s, m):
    j = pl.program_id(1)  # C-tile index

    # cosine = xn @ wn.T via dot_general contracting the last dims of both
    # operands -> native MXU layout (no transpose of the weight tile),
    # bf16 operands with f32 accumulation.
    cosine = lax.dot_general(
        xn_ref[...], wn_ref[...],
        dimension_numbers=(((1,), (1,)), ((), ())),
        preferred_element_type=jnp.float32)                      # (TB, TC) f32

    tb, tc = cosine.shape
    col_ids = j * tc + lax.broadcasted_iota(jnp.int32, (tb, tc), 1)
    match = col_ids == label_ref[...]                            # (TB,1) bcast

    # Fused epilogue: s*(cos - m*one_hot) without materializing a f32 one-hot.
    sc = cosine * s
    out_ref[...] = jnp.where(match, sc - (s * m), sc)


def _round_up(a, b):
    return (a + b - 1) // b * b


def _vmem_capacity_bytes():
    # Generation-aware physical VMEM (v5e/v6e: 128 MiB; v7x: 64 MiB per TC).
    try:
        return int(pltpu.get_tpu_info().vmem_capacity_bytes)
    except Exception:
        return 64 * 1024 * 1024  # conservative fallback (v7x per-TC)


def _block_spec(shape, index_map, buffers=None):
    """BlockSpec with optional N-deep buffering; falls back if unsupported."""
    if buffers is not None:
        try:
            return pl.BlockSpec(shape, index_map,
                                pipeline_mode=pl.Buffered(buffers))
        except Exception:
            pass
    return pl.BlockSpec(shape, index_map)


def cosface_forward(x, weight, label, s=30.0, m=0.3,
                    block_b=512, block_c=256):
    """x: (B, D) f32, weight: (C, D) f32, label: (B,) int -> (B, C) f32."""
    B, D = x.shape
    C, D2 = weight.shape
    assert D == D2

    x = x.astype(jnp.float32)
    w = weight.astype(jnp.float32)

    # Pre-normalize in f32 (one pass over x and W instead of once per tile /
    # per B-tile inside the kernel), then stream bf16 MXU operands.
    xn = (x * lax.rsqrt(
        jnp.maximum(jnp.sum(x * x, -1, keepdims=True), _EPS2))
          ).astype(jnp.bfloat16)
    wn = (w * lax.rsqrt(
        jnp.maximum(jnp.sum(w * w, -1, keepdims=True), _EPS2))
          ).astype(jnp.bfloat16)

    # Layout-aligned tiles: tb multiple of 16 (bf16 packs 2 rows/sublane),
    # tc multiple of 128 (lane-dense output stores), D padded to 128
    # (lane-aligned contraction; zero columns do not change the dot products).
    tb = min(block_b, _round_up(B, 16))
    tc = min(block_c, _round_up(C, 128))
    Dp = _round_up(D, 128)

    # Fit the double/triple-buffered working set into the per-generation VMEM,
    # with headroom left for compiler scratch.
    vmem_cap = _vmem_capacity_bytes()
    budget = max(vmem_cap - 12 * 1024 * 1024, 24 * 1024 * 1024)

    def working_set(tb_, tc_):
        return (2 * tb_ * Dp * 2      # xn tile (bf16, double-buffered)
                + 3 * tc_ * Dp * 2    # wn tile (bf16, up to triple-buffered)
                + 2 * tb_ * tc_ * 4   # out tile (f32, double-buffered)
                + 2 * tb_ * 4)        # labels

    # TODO(synk): for very large D (>~32K) add a K grid axis with an f32
    # accumulator scratch instead of shrinking the output tiles.
    while working_set(tb, tc) > budget and tc > 128:
        tc = max(128, (tc // 2) // 128 * 128)
    while working_set(tb, tc) > budget and tb > 16:
        tb = max(16, (tb // 2) // 16 * 16)

    Bp = _round_up(B, tb)
    Cp = _round_up(C, tc)
    grid = (Bp // tb, Cp // tc)

    xn_p = jnp.pad(xn, ((0, Bp - B), (0, Dp - D)))
    wn_p = jnp.pad(wn, ((0, Cp - C), (0, Dp - D)))
    # Padded rows get label -1 so they never match a (non-negative) column id.
    label_p = jnp.pad(label.astype(jnp.int32).reshape(B, 1),
                      ((0, Bp - B), (0, 0)), constant_values=-1)

    est = working_set(tb, tc)
    vmem_limit = int(min(budget, max(est + 8 * 1024 * 1024, 32 * 1024 * 1024)))

    cost = pl.CostEstimate(
        flops=2 * Bp * Cp * Dp,
        transcendentals=0,
        bytes_accessed=(2 * Bp * Dp            # xn (bf16), once per B-tile row
                        + 2 * grid[0] * Cp * Dp  # wn (bf16), streamed per B-tile
                        + 4 * Bp * Cp            # f32 output
                        + 4 * Bp),               # labels
    )

    kernel = functools.partial(_cosface_kernel, s=float(s), m=float(m))

    out = pl.pallas_call(
        kernel,
        out_shape=jax.ShapeDtypeStruct((Bp, Cp), jnp.float32),
        grid_spec=pltpu.PrefetchScalarGridSpec(
            num_scalar_prefetch=0,
            grid=grid,
            in_specs=[
                _block_spec((tb, Dp), lambda i, j: (i, 0)),   # xn (resident in j)
                _block_spec((tc, Dp), lambda i, j: (j, 0),    # wn (streamed)
                            buffers=3 if grid[1] >= 3 else None),
                _block_spec((tb, 1), lambda i, j: (i, 0)),    # labels
            ],
            out_specs=pl.BlockSpec((tb, tc), lambda i, j: (i, j)),
        ),
        compiler_params=pltpu.CompilerParams(
            # Kernel is stateless across grid points (no hoisted scratch), so
            # both axes are megacore-shardable (helps v7x when the B grid is 1).
            dimension_semantics=("parallel", "parallel"),
            vmem_limit_bytes=vmem_limit,
        ),
        cost_estimate=cost,
    )(xn_p, wn_p, label_p)

    return out[:B, :C]


def _xavier_uniform(key, out_features, in_features):
    bound = (6.0 / (in_features + out_features)) ** 0.5
    return jax.random.uniform(
        key, (out_features, in_features), jnp.float32, -bound, bound)


def _reference_bf16(x, w, label, s, m):
    # Mirrors the kernel numerics (f32 normalization, bf16 MXU inputs, f32 acc).
    xn = (x * lax.rsqrt(jnp.maximum(jnp.sum(x * x, -1, keepdims=True), _EPS2))
          ).astype(jnp.bfloat16)
    wn = (w * lax.rsqrt(jnp.maximum(jnp.sum(w * w, -1, keepdims=True), _EPS2))
          ).astype(jnp.bfloat16)
    cos = lax.dot_general(xn, wn, (((1,), (1,)), ((), ())),
                          preferred_element_type=jnp.float32)
    one_hot = jax.nn.one_hot(label, w.shape[0], dtype=jnp.float32)
    return s * (one_hot * (cos - m) + (1.0 - one_hot) * cos)


def _reference_f32(x, w, label, s, m):
    # True f32 CosFace (what the PyTorch module computes in fp32).
    xn = x / jnp.maximum(jnp.linalg.norm(x, axis=-1, keepdims=True), 1e-12)
    wn = w / jnp.maximum(jnp.linalg.norm(w, axis=-1, keepdims=True), 1e-12)
    cos = xn @ wn.T
    one_hot = jax.nn.one_hot(label, w.shape[0], dtype=jnp.float32)
    return s * (one_hot * (cos - m) + (1.0 - one_hot) * cos)


if __name__ == "__main__":
    key = jax.random.PRNGKey(0)
    k_x, k_w, k_l = jax.random.split(key, 3)

    s_param, m_param = 30.0, 0.3

    # Aligned case: exercises a real (2, 2) grid of (16, 128) output tiles.
    B, in_features, out_features = 32, 128, 256
    x = jax.random.normal(k_x, (B, in_features), jnp.float32)
    weight = _xavier_uniform(k_w, out_features, in_features)
    label = jax.random.randint(k_l, (B,), 0, out_features, jnp.int32)

    out = cosface_forward(x, weight, label, s=s_param, m=m_param,
                          block_b=16, block_c=128)
    out = jax.block_until_ready(out)
    assert out.shape == (B, out_features)

    # Tight check against a reference mirroring the kernel's bf16 MXU numerics.
    exp_bf16 = _reference_bf16(x, weight, label, s_param, m_param)
    assert jnp.allclose(out, exp_bf16, atol=1e-2, rtol=1e-2), \
        "mismatch vs bf16-mirrored reference (aligned case)"
    # Documented tolerance vs. the true f32 CosFace (bf16 MXU quantization,
    # amplified by s=30, gives absolute logit error of a few tenths max).
    exp_f32 = _reference_f32(x, weight, label, s_param, m_param)
    assert jnp.allclose(out, exp_f32, atol=0.5, rtol=0.05), \
        "mismatch vs f32 reference (aligned case)"

    # Unaligned case: exercises the B/C/D padding + slice path.
    k_x2, k_w2, k_l2 = jax.random.split(jax.random.PRNGKey(1), 3)
    B2, D2, C2 = 5, 48, 40
    x2 = jax.random.normal(k_x2, (B2, D2), jnp.float32)
    w2 = _xavier_uniform(k_w2, C2, D2)
    l2 = jax.random.randint(k_l2, (B2,), 0, C2, jnp.int32)

    out2 = jax.block_until_ready(
        cosface_forward(x2, w2, l2, s=s_param, m=m_param))
    assert out2.shape == (B2, C2)
    assert jnp.allclose(out2, _reference_bf16(x2, w2, l2, s_param, m_param),
                        atol=1e-2, rtol=1e-2), \
        "mismatch vs bf16-mirrored reference (padded case)"
    assert jnp.allclose(out2, _reference_f32(x2, w2, l2, s_param, m_param),
                        atol=0.5, rtol=0.05), \
        "mismatch vs f32 reference (padded case)"

    print("KERNEL_OK")
</pallas_src>

<mosaic_0001>
module attributes {stable_mosaic.version = 11 : i64} {
  func.func @_cosface_kernel(%arg0: i32, %arg1: i32, %arg2: memref<16x128xbf16, #tpu.memory_space<vmem>>, %arg3: memref<128x128xbf16, #tpu.memory_space<vmem>>, %arg4: memref<16x1xi32, #tpu.memory_space<vmem>>, %arg5: memref<16x128xf32, #tpu.memory_space<vmem>>) attributes {dimension_semantics = [#tpu.dimension_semantics<parallel>, #tpu.dimension_semantics<parallel>], iteration_bounds = array<i64: 2, 2>, scalar_prefetch = 0 : i64, scratch_operands = 0 : i64, tpu.core_type = #tpu.core_type<tc>, window_params = [{transform_indices = @transform_0, window_bounds = array<i64: 16, 128>}, {transform_indices = @transform_1, window_bounds = array<i64: 128, 128>}, {transform_indices = @transform_2, window_bounds = array<i64: 16, 1>}, {transform_indices = @transform_3, window_bounds = array<i64: 16, 128>}]} {
    %c0 = arith.constant 0 : index
    %c0_0 = arith.constant 0 : index
    %0 = vector.load %arg2[%c0, %c0_0] : memref<16x128xbf16, #tpu.memory_space<vmem>>, vector<16x128xbf16>
    %c0_1 = arith.constant 0 : index
    %c0_2 = arith.constant 0 : index
    %1 = vector.load %arg3[%c0_1, %c0_2] : memref<128x128xbf16, #tpu.memory_space<vmem>>, vector<128x128xbf16>
    %cst = arith.constant dense<0.000000e+00> : vector<16x128xf32>
    %2 = tpu.matmul %0, %1, %cst {dimension_numbers = #tpu.dot_dimension_numbers<[1], [1], [0], [0], [0, 0, 1, 0], [], []>} : vector<16x128xbf16>, vector<128x128xbf16>, vector<16x128xf32> -> vector<16x128xf32>
    %c128_i32 = arith.constant 128 : i32
    %3 = arith.muli %arg1, %c128_i32 : i32
    %4 = tpu.iota {dimensions = array<i32: 1>} : vector<16x128xi32>
    %5 = vector.broadcast %3 : i32 to vector<16x128xi32>
    %6 = arith.addi %5, %4 : vector<16x128xi32>
    %c0_3 = arith.constant 0 : index
    %c0_4 = arith.constant 0 : index
    %7 = vector.load %arg4[%c0_3, %c0_4] : memref<16x1xi32, #tpu.memory_space<vmem>>, vector<16x1xi32>
    %8 = vector.broadcast %7 : vector<16x1xi32> to vector<16x128xi32>
    %9 = arith.cmpi eq, %6, %8 : vector<16x128xi32>
    %cst_5 = arith.constant 3.000000e+01 : f32
    %10 = vector.broadcast %cst_5 : f32 to vector<16x128xf32>
    %11 = arith.mulf %2, %10 : vector<16x128xf32>
    %cst_6 = arith.constant 9.000000e+00 : f32
    %12 = vector.broadcast %cst_6 : f32 to vector<16x128xf32>
    %13 = arith.subf %11, %12 : vector<16x128xf32>
    %14 = arith.select %9, %13, %11 : vector<16x128xi1>, vector<16x128xf32>
    %c0_7 = arith.constant 0 : index
    %c0_8 = arith.constant 0 : index
    %15 = vector.load %arg5[%c0_7, %c0_8] : memref<16x128xf32, #tpu.memory_space<vmem>>, vector<16x128xf32>
    tpu.vector_store %arg5[%c0_7, %c0_8], %14 {strides = array<i32>} : memref<16x128xf32, #tpu.memory_space<vmem>>, vector<16x128xf32>,
    return
  }
  func.func @transform_0(%arg0: i32, %arg1: i32) -> (i32, i32) {
    %c0_i32 = arith.constant 0 : i32
    %c0_i32_0 = arith.constant 0 : i32
    return %arg0, %c0_i32 : i32, i32
  }
  func.func @transform_1(%arg0: i32, %arg1: i32) -> (i32, i32) {
    %c0_i32 = arith.constant 0 : i32
    %c0_i32_0 = arith.constant 0 : i32
    return %arg1, %c0_i32 : i32, i32
  }
  func.func @transform_2(%arg0: i32, %arg1: i32) -> (i32, i32) {
    %c0_i32 = arith.constant 0 : i32
    %c0_i32_0 = arith.constant 0 : i32
    return %arg0, %c0_i32 : i32, i32
  }
  func.func @transform_3(%arg0: i32, %arg1: i32) -> (i32, i32) {
    %c0_i32 = arith.constant 0 : i32
    return %arg0, %arg1 : i32, i32
  }
}

</mosaic_0001>

<llo_original>
// kernel: tpu_custom_call.1
$region0: #{tpu_custom_call.1}
  #allocation0 [shape = 'u32[]', space=smem, size = 0x4, offset = 0x4, fixed_abs, tag = 'smem constant byte address 0x4 - core index']
  #allocation1 [shape = 'u32[144,128]{1,0:T(1,128)}', space=vmem, size = 0x12000, scoped, tag = 'internal scratch']
  %s0 = inlined_call_operand.vmem [shape: bf16[32,128], index: 0, kind: input, shape index: {}]
  %s1 = inlined_call_operand.hbm [shape: bf16[256,128], index: 1, kind: input, shape index: {}]
  %s2 = inlined_call_operand.vmem [shape: s32[32,1], index: 2, kind: input, shape index: {}]
  %s3 = inlined_call_operand.hbm [shape: f32[32,256], index: 3, kind: output, shape index: {}]
  %s4 = sld [smem:[#allocation0]]
  $region49: #{tpu_custom_call.1} parent=0
    _
  %s6 = ssub.s32 1, %s4
  %s7 = scalar_select 0, %s6, %s4
  $region1: #{tpu_custom_call.1} parent=0
    #allocation2 [shape = 'u8[65536]{0}', space=vmem, size = 0x10000, scoped, tag = 'input window, operand 1']
    #allocation3 [shape = 's32[2]{0}', space=sflag, size = 0x8, scoped, tag = 'scoped memory for tpu_custom_call.1']
    #allocation4 [shape = 's32[2]{0}', space=sflag, size = 0x8, scoped, tag = 'scoped memory for tpu_custom_call.1']
    #allocation5 [shape = 'u8[16384]{0}', space=vmem, size = 0x4000, scoped, tag = 'output window, operand 0']
    %8 = vsyncpa [#allocation3], 0
    %s9 = scalar_lea.sflag [#allocation3], 1
    %10 = vsyncpa %s9, 0
    %11 = vsyncpa [#allocation4], 0
    %s12 = scalar_lea.sflag [#allocation4], 1
    %13 = vsyncpa %s12, 0
    loop: start=0, step=1, limit=6
    $region2: #{tpu_custom_call.1} parent=1 // loop_pre_header
      _
    $region3: #{tpu_custom_call.1} parent=1 // loop_header
      %s15 = sphi 0, %s19
      %p16 = scmp.ge.s32.totalorder %s15, 6
      %s22 = sphi 0, %s34
      %s23 = sphi 0, %s30
      %s24 = sphi 0, %s22
      %s25 = sphi 0, %s23
      %s26 = sphi 0, %s24
      %s27 = sphi 0, %s25
      %s37 = sphi 0, %s39
      %s40 = sphi 0, %s37
      %s41 = sphi 0, %s40
      %s57 = sphi 0, %s41
      %s63 = sphi 0, %s65
      %s66 = sphi 0, %s63
      %s67 = sphi 0, %s66
      %s83 = sphi 0, %s67
      %s89 = sphi 0, %s91
      %s92 = sphi 0, %s89
      %s93 = sphi 0, %s92
      %s109 = sphi 0, %s93
      %s117 = sphi 0, %s119
      %s120 = sphi 0, %s117
      %s121 = sphi 0, %s120
      %s137 = sphi 0, %s121
    $region4: #{tpu_custom_call.1} parent=1 // loop_header_branch
      %18 = sbr.rel (%p16) target = $region8
    $region5: #{tpu_custom_call.1} parent=1 // loop_body
      %s20 = ssub.s32 %s15, 1
      %s21 = ssub.s32 %s15, 2
      %s28 = sadd.s32 1, %s23
      %p29 = scmp.ge.s32.totalorder %s28, 2
      %s30 = scalar_select %p29, 0, %s28
      %s31 = sadd.s32 1, %s22
      %s32 = scalar_select %p29, %s31, %s22
      %p33 = scmp.ge.s32.totalorder %s32, 2
      %s34 = scalar_select %p33, 0, %s32
      %s35 = ssub.s32 %s22, %s34
      %p36 = scmp.eq.s32.totalorder %s35, 0
      %s38 = sadd.s32 %s37, 1
      %s39 = scalar_select %p36, %s37, %s38
      %p42 = pneg %p36
      %p43 = scmp.eq.s32.totalorder %s15, 3
      %p44 = por %p42, %p43
      %p45 = scmp.ne.s32.totalorder %s37, %s40
      %p46 = scmp.eq.s32.totalorder %s15, 0
      %p47 = por %p45, %p46
      %p48 = scmp.ne.s32.totalorder %s37, %s40
      %p49 = scmp.eq.s32.totalorder %s20, 3
      %p50 = por %p48, %p49
      %p51 = scmp.ne.s32.totalorder %s40, %s41
      %p52 = scmp.eq.s32.totalorder %s20, 0
      %p53 = por %p51, %p52
      %p54 = scmp.ne.s32.totalorder %s40, %s41
      %p55 = scmp.eq.s32.totalorder %s21, 3
      %p56 = por %p54, %p55
      %p58 = scmp.ne.s32.totalorder %s41, %s57
      %p59 = scmp.eq.s32.totalorder %s21, 0
      %p60 = por %p58, %p59
      %s61 = ssub.s32 %s23, %s30
      %p62 = scmp.eq.s32.totalorder %s61, 0
      %s64 = sadd.s32 %s63, 1
      %s65 = scalar_select %p62, %s63, %s64
      %p68 = pneg %p62
      %p69 = scmp.eq.s32.totalorder %s15, 3
      %p70 = por %p68, %p69
      %p71 = scmp.ne.s32.totalorder %s63, %s66
      %p72 = scmp.eq.s32.totalorder %s15, 0
      %p73 = por %p71, %p72
      %p74 = scmp.ne.s32.totalorder %s63, %s66
      %p75 = scmp.eq.s32.totalorder %s20, 3
      %p76 = por %p74, %p75
      %p77 = scmp.ne.s32.totalorder %s66, %s67
      %p78 = scmp.eq.s32.totalorder %s20, 0
      %p79 = por %p77, %p78
      %p80 = scmp.ne.s32.totalorder %s66, %s67
      %p81 = scmp.eq.s32.totalorder %s21, 3
      %p82 = por %p80, %p81
      %p84 = scmp.ne.s32.totalorder %s67, %s83
      %p85 = scmp.eq.s32.totalorder %s21, 0
      %p86 = por %p84, %p85
      %s87 = ssub.s32 %s22, %s34
      %p88 = scmp.eq.s32.totalorder %s87, 0
      %s90 = sadd.s32 %s89, 1
      %s91 = scalar_select %p88, %s89, %s90
      %p94 = pneg %p88
      %p95 = scmp.eq.s32.totalorder %s15, 3
      %p96 = por %p94, %p95
      %p97 = scmp.ne.s32.totalorder %s89, %s92
      %p98 = scmp.eq.s32.totalorder %s15, 0
      %p99 = por %p97, %p98
      %p100 = scmp.ne.s32.totalorder %s89, %s92
      %p101 = scmp.eq.s32.totalorder %s20, 3
      %p102 = por %p100, %p101
      %p103 = scmp.ne.s32.totalorder %s92, %s93
      %p104 = scmp.eq.s32.totalorder %s20, 0
      %p105 = por %p103, %p104
      %p106 = scmp.ne.s32.totalorder %s92, %s93
      %p107 = scmp.eq.s32.totalorder %s21, 3
      %p108 = por %p106, %p107
      %p110 = scmp.ne.s32.totalorder %s93, %s109
      %p111 = scmp.eq.s32.totalorder %s21, 0
      %p112 = por %p110, %p111
      %s113 = ssub.s32 %s22, %s34
      %s114 = ssub.s32 %s23, %s30
      %s115 = sor.u32 %s113, %s114
      %p116 = scmp.eq.s32.totalorder %s115, 0
      %s118 = sadd.s32 %s117, 1
      %s119 = scalar_select %p116, %s117, %s118
      %p122 = pneg %p116
      %p123 = scmp.eq.s32.totalorder %s15, 3
      %p124 = por %p122, %p123
      %p125 = scmp.ne.s32.totalorder %s117, %s120
      %p126 = scmp.eq.s32.totalorder %s15, 0
      %p127 = por %p125, %p126
      %p128 = scmp.ne.s32.totalorder %s117, %s120
      %p129 = scmp.eq.s32.totalorder %s20, 3
      %p130 = por %p128, %p129
      %p131 = scmp.ne.s32.totalorder %s120, %s121
      %p132 = scmp.eq.s32.totalorder %s20, 0
      %p133 = por %p131, %p132
      %p134 = scmp.ne.s32.totalorder %s120, %s121
      %p135 = scmp.eq.s32.totalorder %s21, 3
      %p136 = por %p134, %p135
      %p138 = scmp.ne.s32.totalorder %s121, %s137
      %p139 = scmp.eq.s32.totalorder %s21, 0
      %p140 = por %p138, %p139
      %p141 = scmp.le.s32.totalorder 1, %s15
      %p142 = scmp.lt.s32.totalorder %s15, 5
      %p143 = pnand %p141, %p142
      %p144 = pneg %p143
      // Predicated region
      $region9: #{tpu_custom_call.1} parent=5 // pred_check
        _
      $region10: #{tpu_custom_call.1} parent=5 // pred_check_branch
        %146 = sbr.rel (%p143) target = $region12
      $region11: #{tpu_custom_call.1} parent=5 // pred_region
        %s147 = ssub.s32 %s15, 1
      $region12: #{tpu_custom_call.1} parent=5 // pred_fallthru
        _
      %p148 = scmp.lt.s32.totalorder %s15, 4
      // Predicated region
      $region13: #{tpu_custom_call.1} parent=5 // pred_check
        %p149 = pneg %p148
      $region14: #{tpu_custom_call.1} parent=5 // pred_check_branch
        %151 = sbr.rel (%p149) target = $region16
      $region15: #{tpu_custom_call.1} parent=5 // pred_region
        // Predicated region
        $region17: #{tpu_custom_call.1} parent=15 // pred_check
          %p152 = pneg %p47
        $region18: #{tpu_custom_call.1} parent=15 // pred_check_branch
          %154 = sbr.rel (%p152) target = $region20
        $region19: #{tpu_custom_call.1} parent=15 // pred_region
          %s155 = smul.u32 2, %s22
          %p156 = scmp.lt.s32.totalorder %s155, 3
          %s157 = scalar_select %p156, %s155, 3
          %s158 = smul.addr %s157, 4
          %s159 = scalar_lea.vmem %s0, %s158
          %s160 = smul.u32 2, %s22
        $region20: #{tpu_custom_call.1} parent=15 // pred_fallthru
          _
        // Predicated region
        $region21: #{tpu_custom_call.1} parent=15 // pred_check
          %p161 = pneg %p73
        $region22: #{tpu_custom_call.1} parent=15 // pred_check_branch
          %163 = sbr.rel (%p161) target = $region24
        $region23: #{tpu_custom_call.1} parent=15 // pred_region
          %s164 = sand.u32 %s63, 1
          %s165 = scalar_lea.sflag [#allocation3], %s164
          %s166 = sand.u32 %s63, 1
          %s167 = smul.addr %s166, 64
          %s168 = scalar_lea.vmem [#allocation2], %s167
          %s169 = smul.u32 16, %s23
          %s171 = ssub.s32 1024, 1024
          %172 = vsyncadd %s165, %s171
          %s173 = smul.addr %s169, 64
          %s174 = scalar_lea.hbm %s1, %s173
          %s175 = sshll.u32 %s168, 4
          %s176 = int_to_ptr.vmem [resolvable:$true] %s175
          %181 = dma.hbm_to_vmem [thread:$0]  %s174, 1024, %s176, %s165, 64, 64, 4
        $region24: #{tpu_custom_call.1} parent=15 // pred_fallthru
          _
        // Predicated region
        $region25: #{tpu_custom_call.1} parent=15 // pred_check
          %p182 = pneg %p99
        $region26: #{tpu_custom_call.1} parent=15 // pred_check_branch
          %184 = sbr.rel (%p182) target = $region28
        $region27: #{tpu_custom_call.1} parent=15 // pred_region
          %s185 = smul.u32 2, %s22
          %p186 = scmp.lt.s32.totalorder %s185, 3
          %s187 = scalar_select %p186, %s185, 3
          %s188 = smul.addr %s187, 8
          %s189 = scalar_lea.vmem %s2, %s188
          %s190 = smul.u32 2, %s22
        $region28: #{tpu_custom_call.1} parent=15 // pred_fallthru
          _
      $region16: #{tpu_custom_call.1} parent=5 // pred_fallthru
        _
      %p191 = scmp.le.s32.totalorder 1, %s15
      %p192 = scmp.lt.s32.totalorder %s15, 5
      %p193 = pnand %p191, %p192
      %p194 = pneg %p193
      // Predicated region
      $region29: #{tpu_custom_call.1} parent=5 // pred_check
        _
      $region30: #{tpu_custom_call.1} parent=5 // pred_check_branch
        %196 = sbr.rel (%p193) target = $region32
      $region31: #{tpu_custom_call.1} parent=5 // pred_region
        %s197 = ssub.s32 %s15, 1
        %s198 = sand.u32 %s66, 1
        %s199 = scalar_lea.sflag [#allocation3], %s198
        %s200 = sand.u32 %s66, 1
        %s201 = smul.addr %s200, 64
        %s202 = scalar_lea.vmem [#allocation2], %s201
        // Predicated region
        $region33: #{tpu_custom_call.1} parent=31 // pred_check
          %p203 = pneg %p79
        $region34: #{tpu_custom_call.1} parent=31 // pred_check_branch
          %205 = sbr.rel (%p203) target = $region36
        $region35: #{tpu_custom_call.1} parent=31 // pred_region
          %206 = dma.done %s199, 1024
        $region36: #{tpu_custom_call.1} parent=31 // pred_fallthru
          _
        %s207 = smul.u32 2, %s24
        %p208 = scmp.lt.s32.totalorder %s207, 3
        %s209 = scalar_select %p208, %s207, 3
        %s210 = smul.addr %s209, 4
        %s211 = scalar_lea.vmem %s0, %s210
        %p212 = pneg %p53
        %p213 = pneg %p50
        %s214 = sand.u32 %s66, 1
        %s215 = scalar_lea.sflag [#allocation3], %s214
        %s216 = sand.u32 %s66, 1
        %s217 = smul.addr %s216, 64
        %s218 = scalar_lea.vmem [#allocation2], %s217
        %p219 = pneg %p79
        %p220 = pneg %p76
        %s221 = smul.u32 2, %s24
        %p222 = scmp.lt.s32.totalorder %s221, 3
        %s223 = scalar_select %p222, %s221, 3
        %s224 = smul.addr %s223, 8
        %s225 = scalar_lea.vmem %s2, %s224
        %p226 = pneg %p105
        %p227 = pneg %p102
        %p228 = pneg %p133
        %p229 = pneg %p130
        %s230 = sand.u32 %s120, 1
        %s231 = scalar_lea.sflag [#allocation4], %s230
        %s232 = sand.u32 %s120, 1
        %s233 = smul.addr %s232, 16
        %s234 = scalar_lea.vmem [#allocation5], %s233
        %s235 = smul.u32 2, %s24
        %p236 = scmp.lt.s32.totalorder %s235, 3
        %s237 = scalar_select %p236, %s235, 3
        %s238 = smul.addr %s237, 4
        %s239 = scalar_lea.vmem %s0, %s238
        %s240 = smul.u32 2, %s24
        %s241 = smul.u32 16, %s25
        %s242 = smul.u32 2, %s24
        %p243 = scmp.lt.s32.totalorder %s242, 3
        %s244 = scalar_select %p243, %s242, 3
        %s245 = smul.addr %s244, 8
        %s246 = scalar_lea.vmem %s2, %s245
        %s247 = smul.u32 2, %s24
        %s248 = smul.u32 2, %s24
        %v250 = vld [vmem:[%s239] sm:$0xf]
        %v251 = vld [vmem:[%s239 + $0x4] sm:$0xf]
        %v252 = vld [vmem:[%s202] sm:$0xf]
        %v253 = vld [vmem:[%s202 + $0x4] sm:$0xf]
        %v254 = vld [vmem:[%s202 + $0x8] sm:$0xf]
        %v255 = vld [vmem:[%s202 + $0xc] sm:$0xf]
        %v256 = vld [vmem:[%s202 + $0x10] sm:$0xf]
        %v257 = vld [vmem:[%s202 + $0x14] sm:$0xf]
        %v258 = vld [vmem:[%s202 + $0x18] sm:$0xf]
        %v259 = vld [vmem:[%s202 + $0x1c] sm:$0xf]
        %v260 = vld [vmem:[%s202 + $0x20] sm:$0xf]
        %v261 = vld [vmem:[%s202 + $0x24] sm:$0xf]
        %v262 = vld [vmem:[%s202 + $0x28] sm:$0xf]
        %v263 = vld [vmem:[%s202 + $0x2c] sm:$0xf]
        %v264 = vld [vmem:[%s202 + $0x30] sm:$0xf]
        %v265 = vld [vmem:[%s202 + $0x34] sm:$0xf]
        %v266 = vld [vmem:[%s202 + $0x38] sm:$0xf]
        %v267 = vld [vmem:[%s202 + $0x3c] sm:$0xf]
        %v270 = vunpack.c.l.b16 %v250
        %v271 = vunpack.c.l.b16 %v251
        %v272 = vpack.c.b16 %v271, %v270
        %v290 = vunpack.c.l.b16 %v252
        %v291 = vunpack.c.l.b16 %v253
        %v292 = vunpack.c.l.b16 %v254
        %v293 = vunpack.c.l.b16 %v255
        %v294 = vunpack.c.l.b16 %v256
        %v295 = vunpack.c.l.b16 %v257
        %v296 = vunpack.c.l.b16 %v258
        %v297 = vunpack.c.l.b16 %v259
        %v298 = vunpack.c.l.b16 %v260
        %v299 = vunpack.c.l.b16 %v261
        %v300 = vunpack.c.l.b16 %v262
        %v301 = vunpack.c.l.b16 %v263
        %v302 = vunpack.c.l.b16 %v264
        %v303 = vunpack.c.l.b16 %v265
        %v304 = vunpack.c.l.b16 %v266
        %v305 = vunpack.c.l.b16 %v267
        %v306 = vpack.c.b16 %v291, %v290
        %v307 = vpack.c.b16 %v293, %v292
        %v308 = vpack.c.b16 %v295, %v294
        %v309 = vpack.c.b16 %v297, %v296
        %v310 = vpack.c.b16 %v299, %v298
        %v311 = vpack.c.b16 %v301, %v300
        %v312 = vpack.c.b16 %v303, %v302
        %v313 = vpack.c.b16 %v305, %v304
        %322 = vmatprep.subr.bf16.mxu0 0
        %323 = vmatpush1.bf16.xpose.msra.mxu0 %v306
        %324 = vmatprep.subr.bf16.mxu0 0
        %325 = vmatpush1.bf16.xpose.msra.mxu0 %v307
        %326 = vmatprep.subr.bf16.mxu0 0
        %327 = vmatpush1.bf16.xpose.msra.mxu0 %v308
        %328 = vmatprep.subr.bf16.mxu0 0
        %329 = vmatpush1.bf16.xpose.msra.mxu0 %v309
        %330 = vmatprep.subr.bf16.mxu0 0
        %331 = vmatpush1.bf16.xpose.msra.mxu0 %v310
        %332 = vmatprep.subr.bf16.mxu0 0
        %333 = vmatpush1.bf16.xpose.msra.mxu0 %v311
        %334 = vmatprep.subr.bf16.mxu0 0
        %335 = vmatpush1.bf16.xpose.msra.mxu0 %v312
        %336 = vmatprep.subr.bf16.mxu0 0
        %337 = vmatpush1.bf16.xpose.msra.mxu0 %v313
        %338 = vmatprep.subr.bf16.mxu0 0
        %339 = vmatpush1.bf16.xpose.msra.mxu0 0
        %340 = vmatprep.subr.bf16.mxu0 0
        %341 = vmatpush1.bf16.xpose.msra.mxu0 0
        %342 = vmatprep.subr.bf16.mxu0 0
        %343 = vmatpush1.bf16.xpose.msra.mxu0 0
        %344 = vmatprep.subr.bf16.mxu0 0
        %345 = vmatpush1.bf16.xpose.msra.mxu0 0
        %346 = vmatprep.subr.bf16.mxu0 0
        %347 = vmatpush1.bf16.xpose.msra.mxu0 0
        %348 = vmatprep.subr.bf16.mxu0 0
        %349 = vmatpush1.bf16.xpose.msra.mxu0 0
        %350 = vmatprep.subr.bf16.mxu0 0
        %351 = vmatpush1.bf16.xpose.msra.mxu0 0
        %352 = vmatprep.subr.bf16.mxu0 0
        %353 = vmatpush1.bf16.xpose.msra.mxu0 0
        %354 = vmatprep.mubr.bf16.mxu0 0
        %355 = vmatmul.mubr.bf16.gmra.mrb[0].mxu0 %v272
        %v356 = vpop.f32.mrb[0].mxu0
        %v357 = vadd.f32 0.0, %v356
        %v358 = vpop.f32.mrb[0].mxu0
        %v359 = vpop.f32.mrb[0].mxu0
        %v360 = vadd.f32 0.0, %v359
        %v361 = vpop.f32.mrb[0].mxu0
        %362 = vdwg.mxu0
        %s363 = smul.u32 %s25, 128
        %v364 = vlaneseq
        %v365 = vand.u32 %v364, 127
        %v366 = vstv %s363
        %v367 = vadd.s32 %v366, %v365
        %v368 = vld [vmem:[%s246] sm:$0xff]
        %v369 = vld [vmem:[%s246 + $0x8] sm:$0xff]
        %370 = vset.pattern.permute.xlu0 0
        %371 = vperm.xlu0 %370, %v368
        %v372 = vpop.permute.xlu0 %371
        %373 = vset.pattern.permute.xlu0 0
        %374 = vperm.xlu0 %373, %v369
        %v375 = vpop.permute.xlu0 %374
        %vm376 = vcmp.eq.s32.totalorder %v367, %v372
        %vm377 = vcmp.eq.s32.totalorder %v367, %v375
        %v378 = vmul.f32 %v357, 30.0
        %v379 = vmul.f32 %v360, 30.0
        %v380 = vsub.f32 %v378, 9.0
        %v381 = vsub.f32 %v379, 9.0
        %v382 = vsel %vm376, %v380, %v378
        %v383 = vsel %vm377, %v381, %v379
        %384 = vst [vmem:[%s234] sm:$0xff] %v382
        %385 = vst [vmem:[%s234 + $0x8] sm:$0xff] %v383
        %s386 = sand.u32 %s120, 1
        %s387 = scalar_lea.sflag [#allocation4], %s386
        %s388 = sand.u32 %s120, 1
        %s389 = smul.addr %s388, 16
        %s390 = scalar_lea.vmem [#allocation5], %s389
        // Predicated region
        $region37: #{tpu_custom_call.1} parent=31 // pred_check
          %p391 = pneg %p130
        $region38: #{tpu_custom_call.1} parent=31 // pred_check_branch
          %393 = sbr.rel (%p391) target = $region40
        $region39: #{tpu_custom_call.1} parent=31 // pred_region
          %s394 = smul.u32 2, %s24
          %s396 = ssub.s32 256, 256
          %397 = vsyncadd %s387, %s396
          %s398 = smul.addr %s394, 2
          %s399 = sadd.s32 %s25, %s398
          %s400 = smul.addr %s399, 128
          %s401 = scalar_lea.hbm %s3, %s400
          %s402 = sshll.u32 %s390, 4
          %s403 = int_to_ptr.vmem [resolvable:$true] %s402
          %408 = dma.vmem_to_hbm [thread:$0]  %s403, 256, %s401, %s387, 128, 256, 8
        $region40: #{tpu_custom_call.1} parent=31 // pred_fallthru
          _
      $region32: #{tpu_custom_call.1} parent=5 // pred_fallthru
        _
      %p409 = scmp.le.s32.totalorder 2, %s15
      // Predicated region
      $region41: #{tpu_custom_call.1} parent=5 // pred_check
        %p410 = pneg %p409
      $region42: #{tpu_custom_call.1} parent=5 // pred_check_branch
        %412 = sbr.rel (%p410) target = $region44
      $region43: #{tpu_custom_call.1} parent=5 // pred_region
        %s413 = ssub.s32 %s15, 2
        // Predicated region
        $region45: #{tpu_custom_call.1} parent=43 // pred_check
          %p414 = pneg %p136
        $region46: #{tpu_custom_call.1} parent=43 // pred_check_branch
          %416 = sbr.rel (%p414) target = $region48
        $region47: #{tpu_custom_call.1} parent=43 // pred_region
          %s417 = sand.u32 %s121, 1
          %s418 = scalar_lea.sflag [#allocation4], %s417
          %s419 = sand.u32 %s121, 1
          %s420 = smul.addr %s419, 16
          %s421 = scalar_lea.vmem [#allocation5], %s420
          %422 = dma.done %s418, 256
        $region48: #{tpu_custom_call.1} parent=43 // pred_fallthru
          _
      $region44: #{tpu_custom_call.1} parent=5 // pred_fallthru
        _
    $region6: #{tpu_custom_call.1} parent=1 // loop_footer
      %s19 = sadd.s32 1, %s15
    $region7: #{tpu_custom_call.1} parent=1 // loop_footer_branch
      %14 = sbr.rel target = $region3
    $region8: #{tpu_custom_call.1} parent=1 // loop_exit
      _
    %423 = vsyncpa [#allocation3], 1
    %s424 = scalar_lea.sflag [#allocation3], 1
    %425 = vsyncpa %s424, 1
    %426 = vsyncpa [#allocation4], 1
    %s427 = scalar_lea.sflag [#allocation4], 1
    %428 = vsyncpa %s427, 1

</llo_original>
